<compile_context>
chip_gen: v6e
topology: v6e:2x2x1
jax: 0.10.0
libtpu: 0.0.40
codegen_flags: <defaults>
</compile_context>

<pallas_src>
import functools

import jax
import jax.numpy as jnp
from jax.experimental import pallas as pl
from jax.experimental.pallas import tpu as pltpu

EPS = 1e-7
LANE = 128


def _weighted_bce_kernel(o_ref, t_ref, out_ref, acc_ref, *,
                         weight: float, hard_labels: bool, needs_mask: bool,
                         tm: int, steps: int, total_rows: int, acc_rows: int):
    c = pl.program_id(0)          # parallel chunk index
    s = pl.program_id(1)          # sequential step inside the chunk

    @pl.when(s == 0)
    def _():
        acc_ref[...] = jnp.zeros_like(acc_ref)

    # Cast in-kernel (VPU, free) so bf16 inputs cross HBM at half width.
    p = jnp.clip(o_ref[...].astype(jnp.float32), EPS, 1.0 - EPS)
    t = t_ref[...].astype(jnp.float32)

    if hard_labels:
        # Hard {0,1} targets: one EUP log per element instead of two.
        pos = t > 0.5
        q = jnp.where(pos, p, 1.0 - p)
        coef = jnp.where(pos, jnp.float32(weight), jnp.float32(1.0))
        loss = -coef * jnp.log(q)
    else:
        loss = -(weight * t * jnp.log(p) + (1.0 - t) * jnp.log(1.0 - p))

    if needs_mask:
        # Zero contributions from ragged / fully-out-of-range rows.  Only a
        # (tm,1) sublane iota + compare + select: VPU work hidden under EUP/DMA.
        m = loss.shape[0]
        row0 = (c * steps + s) * tm                      # un-clamped global row
        rows = row0 + jax.lax.broadcasted_iota(jnp.int32, (m, 1), 0)
        loss = jnp.where(rows < total_rows, loss, 0.0)

    # Fold rows into the resident (acc_rows, C) accumulator with pure VPU adds
    # (no per-step XLU reduce, no serial scalar read-modify-write).
    m, C = loss.shape
    acc_ref[...] += jnp.sum(loss.reshape(m // acc_rows, acc_rows, C), axis=0)

    @pl.when(s == steps - 1)
    def _():
        out_ref[...] = acc_ref[...]


def weighted_bce(output, target, mask=None, *, weight=1.0, reduction="mean",
                 hard_labels=False, tm=4096, n_par=2):
    """Weighted BCE.  output/target/mask: (B, T).  Returns a scalar f32 loss.

    `mask` is accepted for API parity with the torch module but is not used in
    the loss computation (the torch forward ignores it too).
    `hard_labels=True` enables an exact one-log fast path valid when target
    values are in {0, 1}.
    """
    del mask
    assert output.ndim == 2 and output.shape == target.shape, "expect (B, T) inputs"
    if reduction not in ("mean", "sum"):
        # TODO(synk): reduction='none' (elementwise output) not implemented.
        raise NotImplementedError(f"reduction={reduction!r} not supported")

    B, T = output.shape
    total = B * T
    weight = float(weight)

    # ---- 2-D view without any HBM copy ------------------------------------
    if total % LANE == 0:
        R, C = total // LANE, LANE          # lane-dense view; reshape is a bitcast
        o2 = output.reshape(R, C)
        t2 = target.reshape(R, C)
    else:
        R, C = B, T                         # tile the raw array; lane dim = full T
        o2, t2 = output, target

    # ---- tile sizing (VMEM-budget capped; fits v5e's 16 MiB scoped default) -
    itembytes = o2.dtype.itemsize + t2.dtype.itemsize
    budget = 12 * 1024 * 1024               # 2 inputs x 2 pipeline buffers <= ~12 MiB
    tm_cap = max(32, (budget // (2 * C * itembytes)) // 32 * 32)
    tm_eff = min(max(32, (int(tm) // 32) * 32), tm_cap)   # multiple of 32 (any dtype)
    if tm_eff >= R:
        tm_eff = R                          # single block: full-extent sublane dim

    blocks_total = pl.cdiv(R, tm_eff)
    n_par_eff = max(1, min(int(n_par), blocks_total))     # >=2 uses both v7x TCs
    steps = pl.cdiv(blocks_total, n_par_eff)
    padded_rows = n_par_eff * steps * tm_eff
    needs_mask = padded_rows != R
    needs_clamp = n_par_eff * steps != blocks_total
    acc_rows = 8 if tm_eff % 8 == 0 else tm_eff

    if needs_clamp:
        last_block = blocks_total - 1

        def in_map(c, s):
            # Keep DMAs in bounds; garbage blocks are zeroed by the row mask.
            return (jnp.minimum(c * steps + s, last_block), 0)
    else:
        def in_map(c, s):
            return (c * steps + s, 0)

    kernel = functools.partial(
        _weighted_bce_kernel,
        weight=weight, hard_labels=bool(hard_labels), needs_mask=needs_mask,
        tm=tm_eff, steps=steps, total_rows=R, acc_rows=acc_rows)

    out_bytes = n_par_eff * acc_rows * C * 4
    cost = pl.CostEstimate(
        flops=6 * total,
        transcendentals=(1 if hard_labels else 2) * total,
        bytes_accessed=total * itembytes + out_bytes)

    partials = pl.pallas_call(
        kernel,
        out_shape=jax.ShapeDtypeStruct((n_par_eff * acc_rows, C), jnp.float32),
        grid_spec=pltpu.PrefetchScalarGridSpec(
            num_scalar_prefetch=0,
            grid=(n_par_eff, steps),
            in_specs=[
                pl.BlockSpec((tm_eff, C), in_map),     # output probs tile
                pl.BlockSpec((tm_eff, C), in_map),     # target tile
            ],
            out_specs=pl.BlockSpec((acc_rows, C), lambda c, s: (c, 0)),
            scratch_shapes=[pltpu.VMEM((acc_rows, C), jnp.float32)]),
        compiler_params=pltpu.CompilerParams(
            dimension_semantics=("parallel", "arbitrary")),
        cost_estimate=cost,
    )(o2, t2)

    total_loss = jnp.sum(partials, dtype=jnp.float32)    # tiny tree reduce in XLA
    if reduction == "mean":
        return total_loss / jnp.float32(total)
    return total_loss                                     # "sum"


def reference_weighted_bce(output, target, *, weight=1.0, reduction="mean"):
    p = jnp.clip(output.astype(jnp.float32), EPS, 1.0 - EPS)
    t = target.astype(jnp.float32)
    loss = -(weight * t * jnp.log(p) + (1.0 - t) * jnp.log(1.0 - p))
    if reduction == "mean":
        return jnp.mean(loss)
    if reduction == "sum":
        return jnp.sum(loss)
    return loss


if __name__ == "__main__":
    key = jax.random.PRNGKey(0)

    def run_case(B, T, *, dtype, hard_t, weight, tm, n_par, hard_labels, red, k):
        k_o, k_t = jax.random.split(k)
        out = jax.random.uniform(k_o, (B, T), minval=0.01, maxval=0.99).astype(dtype)
        if hard_t:
            tgt = (jax.random.uniform(k_t, (B, T)) > 0.5).astype(dtype)
        else:
            tgt = jax.random.uniform(k_t, (B, T)).astype(dtype)
        msk = jnp.ones((B, T), dtype)          # torch-parity arg, unused by forward
        got = jax.block_until_ready(
            weighted_bce(out, tgt, msk, weight=weight, reduction=red,
                         hard_labels=hard_labels, tm=tm, n_par=n_par))
        ref = reference_weighted_bce(out, tgt, weight=weight, reduction=red)
        assert got.shape == (), f"expected scalar, got {got.shape}"
        assert jnp.allclose(got, ref, rtol=1e-4, atol=1e-5), (
            f"mismatch (B={B},T={T},{dtype},{red},hard={hard_labels}): {got} vs {ref}")

    keys = jax.random.split(key, 5)
    # (2, 200): T not a multiple of 128 -> direct (B, T) tiling, no pad / no copy.
    run_case(2, 200, dtype=jnp.float32, hard_t=True, weight=2.0, tm=4096, n_par=2,
             hard_labels=False, red="mean", k=keys[0])
    run_case(2, 200, dtype=jnp.float32, hard_t=True, weight=2.0, tm=4096, n_par=2,
             hard_labels=True, red="sum", k=keys[1])
    # Multi-block + dual-chunk ("parallel") + ragged tail + clamped tail block.
    run_case(50, 384, dtype=jnp.float32, hard_t=True, weight=3.0, tm=32, n_par=2,
             hard_labels=True, red="mean", k=keys[2])
    run_case(50, 384, dtype=jnp.float32, hard_t=False, weight=3.0, tm=32, n_par=2,
             hard_labels=False, red="sum", k=keys[3])
    # bf16 inputs (halved HBM traffic path), soft targets, two chunks.
    run_case(8, 1024, dtype=jnp.bfloat16, hard_t=False, weight=1.5, tm=32, n_par=2,
             hard_labels=False, red="mean", k=keys[4])

    print("KERNEL_OK")
</pallas_src>

<mosaic_0001>
module attributes {stable_mosaic.version = 11 : i64} {
  func.func @_weighted_bce_kernel(%arg0: i32, %arg1: i32, %arg2: memref<2x200xf32, #tpu.memory_space<vmem>>, %arg3: memref<2x200xf32, #tpu.memory_space<vmem>>, %arg4: memref<2x200xf32, #tpu.memory_space<vmem>>, %arg5: memref<2x200xf32, #tpu.memory_space<vmem>>) attributes {dimension_semantics = [#tpu.dimension_semantics<parallel>, #tpu.dimension_semantics<arbitrary>], iteration_bounds = array<i64: 1, 1>, scalar_prefetch = 0 : i64, scratch_operands = 1 : i64, tpu.core_type = #tpu.core_type<tc>, window_params = [{transform_indices = @transform_0, window_bounds = array<i64: 2, 200>}, {transform_indices = @transform_1, window_bounds = array<i64: 2, 200>}, {transform_indices = @transform_2, window_bounds = array<i64: 2, 200>}]} {
    %c0_i32 = arith.constant 0 : i32
    %0 = arith.cmpi eq, %arg1, %c0_i32 : i32
    %1 = arith.extui %0 : i1 to i32
    %c0_i32_0 = arith.constant 0 : i32
    %2 = arith.cmpi ne, %1, %c0_i32_0 : i32
    scf.if %2 {
      %cst_16 = arith.constant 0.000000e+00 : f32
      %30 = vector.broadcast %cst_16 : f32 to vector<2x200xf32>
      %c0_17 = arith.constant 0 : index
      %c0_18 = arith.constant 0 : index
      %31 = vector.load %arg5[%c0_17, %c0_18] : memref<2x200xf32, #tpu.memory_space<vmem>>, vector<2x200xf32>
      tpu.vector_store %arg5[%c0_17, %c0_18], %30 {strides = array<i32>} : memref<2x200xf32, #tpu.memory_space<vmem>>, vector<2x200xf32>,
    } else {
    }
    %c0 = arith.constant 0 : index
    %c0_1 = arith.constant 0 : index
    %3 = vector.load %arg2[%c0, %c0_1] : memref<2x200xf32, #tpu.memory_space<vmem>>, vector<2x200xf32>
    %cst = arith.constant 1.000000e-07 : f32
    %cst_2 = arith.constant 0.99999988 : f32
    %4 = vector.broadcast %cst : f32 to vector<2x200xf32>
    %5 = arith.maximumf %4, %3 : vector<2x200xf32>
    %6 = vector.broadcast %cst_2 : f32 to vector<2x200xf32>
    %7 = arith.minimumf %6, %5 : vector<2x200xf32>
    %c0_3 = arith.constant 0 : index
    %c0_4 = arith.constant 0 : index
    %8 = vector.load %arg3[%c0_3, %c0_4] : memref<2x200xf32, #tpu.memory_space<vmem>>, vector<2x200xf32>
    %cst_5 = arith.constant 2.000000e+00 : f32
    %9 = vector.broadcast %cst_5 : f32 to vector<2x200xf32>
    %10 = arith.mulf %9, %8 : vector<2x200xf32>
    %11 = math.log %7 : vector<2x200xf32>
    %12 = arith.mulf %10, %11 : vector<2x200xf32>
    %cst_6 = arith.constant 1.000000e+00 : f32
    %13 = vector.broadcast %cst_6 : f32 to vector<2x200xf32>
    %14 = arith.subf %13, %8 : vector<2x200xf32>
    %cst_7 = arith.constant 1.000000e+00 : f32
    %15 = vector.broadcast %cst_7 : f32 to vector<2x200xf32>
    %16 = arith.subf %15, %7 : vector<2x200xf32>
    %17 = math.log %16 : vector<2x200xf32>
    %18 = arith.mulf %14, %17 : vector<2x200xf32>
    %19 = arith.addf %12, %18 : vector<2x200xf32>
    %cst_8 = arith.constant 0.000000e+00 : f32
    %20 = vector.broadcast %cst_8 : f32 to vector<2x200xf32>
    %21 = arith.subf %20, %19 : vector<2x200xf32>
    %c0_9 = arith.constant 0 : index
    %c0_10 = arith.constant 0 : index
    %22 = vector.load %arg5[%c0_9, %c0_10] : memref<2x200xf32, #tpu.memory_space<vmem>>, vector<2x200xf32>
    %23 = vector.shape_cast %21 : vector<2x200xf32> to vector<1x2x200xf32>
    %cst_11 = arith.constant dense<0.000000e+00> : vector<2x200xf32>
    %24 = vector.multi_reduction <add>, %23, %cst_11 [0] : vector<1x2x200xf32> to vector<2x200xf32>
    %25 = arith.addf %22, %24 : vector<2x200xf32>
    %c0_12 = arith.constant 0 : index
    %c0_13 = arith.constant 0 : index
    %26 = vector.load %arg5[%c0_12, %c0_13] : memref<2x200xf32, #tpu.memory_space<vmem>>, vector<2x200xf32>
    tpu.vector_store %arg5[%c0_12, %c0_13], %25 {strides = array<i32>} : memref<2x200xf32, #tpu.memory_space<vmem>>, vector<2x200xf32>,
    %c0_i32_14 = arith.constant 0 : i32
    %27 = arith.cmpi eq, %arg1, %c0_i32_14 : i32
    %28 = arith.extui %27 : i1 to i32
    %c0_i32_15 = arith.constant 0 : i32
    %29 = arith.cmpi ne, %28, %c0_i32_15 : i32
    scf.if %29 {
      %c0_16 = arith.constant 0 : index
      %c0_17 = arith.constant 0 : index
      %30 = vector.load %arg5[%c0_16, %c0_17] : memref<2x200xf32, #tpu.memory_space<vmem>>, vector<2x200xf32>
      %c0_18 = arith.constant 0 : index
      %c0_19 = arith.constant 0 : index
      %31 = vector.load %arg4[%c0_18, %c0_19] : memref<2x200xf32, #tpu.memory_space<vmem>>, vector<2x200xf32>
      tpu.vector_store %arg4[%c0_18, %c0_19], %30 {strides = array<i32>} : memref<2x200xf32, #tpu.memory_space<vmem>>, vector<2x200xf32>,
    } else {
    }
    return
  }
  func.func @transform_0(%arg0: i32, %arg1: i32) -> (i32, i32) {
    %c1_i32 = arith.constant 1 : i32
    %0 = arith.muli %arg0, %c1_i32 : i32
    %1 = arith.addi %0, %arg1 : i32
    %c0_i32 = arith.constant 0 : i32
    %c0_i32_0 = arith.constant 0 : i32
    return %1, %c0_i32 : i32, i32
  }
  func.func @transform_1(%arg0: i32, %arg1: i32) -> (i32, i32) {
    %c1_i32 = arith.constant 1 : i32
    %0 = arith.muli %arg0, %c1_i32 : i32
    %1 = arith.addi %0, %arg1 : i32
    %c0_i32 = arith.constant 0 : i32
    %c0_i32_0 = arith.constant 0 : i32
    return %1, %c0_i32 : i32, i32
  }
  func.func @transform_2(%arg0: i32, %arg1: i32) -> (i32, i32) {
    %c0_i32 = arith.constant 0 : i32
    %c0_i32_0 = arith.constant 0 : i32
    return %arg0, %c0_i32 : i32, i32
  }
}

</mosaic_0001>

<llo_original>
// kernel: tpu_custom_call.1
$region0: #{tpu_custom_call.1}
  #allocation0 [shape = 'u32[]', space=smem, size = 0x4, offset = 0x4, fixed_abs, tag = 'smem constant byte address 0x4 - core index']
  #allocation1 [shape = 'u32[144,128]{1,0:T(1,128)}', space=vmem, size = 0x12000, scoped, tag = 'internal scratch']
  #allocation2 [shape = 'f32[2,200]{1,0:T(2,128)}', space=vmem, size = 0x800, scoped, tag = 'scratch operand']
  %s0 = inlined_call_operand.hbm [shape: f32[2,200], index: 0, kind: input, shape index: {}]
  %s1 = inlined_call_operand.hbm [shape: f32[2,200], index: 1, kind: input, shape index: {}]
  %s2 = inlined_call_operand.hbm [shape: f32[2,200], index: 2, kind: output, shape index: {}]
  %s3 = sld [smem:[#allocation0]]
  $region34: #{tpu_custom_call.1} parent=0
    _
  %s5 = ssub.s32 1, %s3
  %s6 = scalar_select 0, %s5, %s3
  $region1: #{tpu_custom_call.1} parent=0
    #allocation3 [shape = 'u8[2048]{0}', space=vmem, size = 0x800, scoped, tag = 'input window, operand 0, single buffered']
    #allocation4 [shape = 's32[1]{0}', space=sflag, size = 0x4, scoped, tag = 'scoped memory for tpu_custom_call.1']
    #allocation5 [shape = 's32[1]{0}', space=sflag, size = 0x4, scoped, tag = 'scoped memory for tpu_custom_call.1']
    #allocation6 [shape = 'u8[2048]{0}', space=vmem, size = 0x800, scoped, tag = 'input window, operand 1, single buffered']
    #allocation7 [shape = 's32[1]{0}', space=sflag, size = 0x4, scoped, tag = 'scoped memory for tpu_custom_call.1']
    #allocation8 [shape = 'u8[2048]{0}', space=vmem, size = 0x800, scoped, tag = 'output window, operand 0, single buffered']
    %7 = vsyncpa [#allocation4], 0
    %8 = vsyncpa [#allocation7], 0
    %9 = vsyncpa [#allocation5], 0
    // Predicated region
    $region2: #{tpu_custom_call.1} parent=1 // pred_check
      _
    $region3: #{tpu_custom_call.1} parent=1 // pred_check_branch
      %11 = sbr.rel (0) target = $region5
    $region4: #{tpu_custom_call.1} parent=1 // pred_region
      %s12 = sadd.s32 0, 0
      %s14 = ssub.s32 64, 64
      %15 = vsyncadd [#allocation4], %s14
      %s16 = smul.addr %s12, 2
      %s17 = smul.addr %s16, 32
      %s18 = scalar_lea.hbm %s0, %s17
      %s20 = sshll.u32 [#allocation3], 4
      %s21 = int_to_ptr.vmem [resolvable:$true] %s20
      %23 = dma.hbm_to_vmem [thread:$0]  %s18, 64, %s21, [#allocation4]
    $region5: #{tpu_custom_call.1} parent=1 // pred_fallthru
      _
    // Predicated region
    $region6: #{tpu_custom_call.1} parent=1 // pred_check
      _
    $region7: #{tpu_custom_call.1} parent=1 // pred_check_branch
      %25 = sbr.rel (0) target = $region9
    $region8: #{tpu_custom_call.1} parent=1 // pred_region
      %s26 = sadd.s32 0, 0
      %s28 = ssub.s32 64, 64
      %29 = vsyncadd [#allocation7], %s28
      %s30 = smul.addr %s26, 2
      %s31 = smul.addr %s30, 32
      %s32 = scalar_lea.hbm %s1, %s31
      %s34 = sshll.u32 [#allocation6], 4
      %s35 = int_to_ptr.vmem [resolvable:$true] %s34
      %37 = dma.hbm_to_vmem [thread:$0]  %s32, 64, %s35, [#allocation7]
    $region9: #{tpu_custom_call.1} parent=1 // pred_fallthru
      _
    // Predicated region
    $region10: #{tpu_custom_call.1} parent=1 // pred_check
      _
    $region11: #{tpu_custom_call.1} parent=1 // pred_check_branch
      %39 = sbr.rel (0) target = $region13
    $region12: #{tpu_custom_call.1} parent=1 // pred_region
      %40 = dma.done [#allocation4], 64
    $region13: #{tpu_custom_call.1} parent=1 // pred_fallthru
      _
    // Predicated region
    $region14: #{tpu_custom_call.1} parent=1 // pred_check
      _
    $region15: #{tpu_custom_call.1} parent=1 // pred_check_branch
      %42 = sbr.rel (0) target = $region17
    $region16: #{tpu_custom_call.1} parent=1 // pred_region
      %43 = dma.done [#allocation7], 64
    $region17: #{tpu_custom_call.1} parent=1 // pred_fallthru
      _
    %s44 = sadd.s32 0, 0
    %s45 = sadd.s32 0, 0
    %p46 = scmp.eq.s32.totalorder 0, 0
    // Predicated region
    $region18: #{tpu_custom_call.1} parent=1 // pred_check
      %p47 = pneg %p46
    $region19: #{tpu_custom_call.1} parent=1 // pred_check_branch
      %49 = sbr.rel (%p47) target = $region21
    $region20: #{tpu_custom_call.1} parent=1 // pred_region
      %vm50 = vcmask 1041408
      %vm51 = vcmask 584706
      %vm52 = vmor %vm51, %vm50
      %53 = vst.msk [vmem:[#allocation2] sm:$0xf] %vm52, 0.0
    $region21: #{tpu_custom_call.1} parent=1 // pred_fallthru
      _
    %v54 = vld [vmem:[#allocation3] sm:$0xf]
    %v55 = vmax.f32 %v54, 1e-07
    %v56 = vmin.f32 %v55, 0.9999999
    %v57 = vld [vmem:[#allocation6] sm:$0xf]
    %v58 = vmul.f32 %v57, 2.0
    %v59 = vlog2.pop %v56
    %v60 = vmul.f32 %v59, 0.6931472
    %v61 = vmul.f32 %v58, %v60
    %v62 = vsub.f32 1.0, %v57
    %v63 = vsub.f32 1.0, %v56
    %v64 = vlog2.pop %v63
    %v65 = vmul.f32 %v64, 0.6931472
    %v66 = vmul.f32 %v62, %v65
    %v67 = vadd.f32 %v61, %v66
    %v68 = vsub.f32 0.0, %v67
    %v69 = vld [vmem:[#allocation2] sm:$0xf]
    %v70 = vadd.f32 %v68, 0.0
    %v71 = vadd.f32 %v69, %v70
    %vm72 = vcmask 1041408
    %vm73 = vcmask 584706
    %vm74 = vmor %vm73, %vm72
    %75 = vst.msk [vmem:[#allocation2] sm:$0xf] %vm74, %v71
    // Predicated region
    $region22: #{tpu_custom_call.1} parent=1 // pred_check
      %p76 = pneg %p46
    $region23: #{tpu_custom_call.1} parent=1 // pred_check_branch
      %78 = sbr.rel (%p76) target = $region25
    $region24: #{tpu_custom_call.1} parent=1 // pred_region
      %v79 = vld [vmem:[#allocation2] sm:$0xf]
      %80 = vst.msk [vmem:[#allocation8] sm:$0xf] %vm74, %v79
    $region25: #{tpu_custom_call.1} parent=1 // pred_fallthru
      _
    // Predicated region
    $region26: #{tpu_custom_call.1} parent=1 // pred_check
      _
    $region27: #{tpu_custom_call.1} parent=1 // pred_check_branch
      %82 = sbr.rel (0) target = $region29
    $region28: #{tpu_custom_call.1} parent=1 // pred_region
      %s84 = ssub.s32 64, 64
      %85 = vsyncadd [#allocation5], %s84
      %s87 = sshll.u32 [#allocation8], 4
      %s88 = int_to_ptr.vmem [resolvable:$true] %s87
      %90 = dma.vmem_to_hbm [thread:$0]  %s88, 64, %s2, [#allocation5]
    $region29: #{tpu_custom_call.1} parent=1 // pred_fallthru
      _
    // Predicated region
    $region30: #{tpu_custom_call.1} parent=1 // pred_check
      _
    $region31: #{tpu_custom_call.1} parent=1 // pred_check_branch
      %92 = sbr.rel (0) target = $region33
    $region32: #{tpu_custom_call.1} parent=1 // pred_region
      %93 = dma.done [#allocation5], 64
    $region33: #{tpu_custom_call.1} parent=1 // pred_fallthru
      _
    %94 = vsyncpa [#allocation4], 1
    %95 = vsyncpa [#allocation7], 1
    %96 = vsyncpa [#allocation5], 1

</llo_original>
